<compile_context>
chip_gen: v5e
topology: v5e:2x2
jax: 0.10.0
libtpu: 0.0.40
codegen_flags: <defaults>
</compile_context>

<pallas_src>
import jax
import jax.numpy as jnp
from jax.experimental import pallas as pl
from jax.experimental.pallas import tpu as pltpu


def _subgroup_kernel(x_ref, w_ref, b_ref, o_ref):
    # x_ref/o_ref: (nb, C, tl) -- channels on sublanes, positions on lanes.
    # w_ref: (C, C) folded weight;  b_ref: (C, 1) f32 folded bias.
    w = w_ref[...]
    b = b_ref[...]
    for n in range(x_ref.shape[0]):          # nb is a small static constant
        y = jnp.dot(w, x_ref[n], preferred_element_type=jnp.float32) + b
        o_ref[n] = y.astype(o_ref.dtype)


def _vmem_capacity_bytes():
    """Per-core VMEM capacity; falls back to the smallest current part (v7x)."""
    try:
        return int(pltpu.get_tpu_info().vmem_capacity_bytes)
    except Exception:
        return 64 << 20


def _pick_tiles(N, C, L, itemsize, vmem_cap):
    """Pick (nb, tl): batch rows per step and the lane-dense L tile width."""
    # Generation-aware activation-tile budget (~1/3 of VMEM, capped at 48 MiB):
    # ~42 MiB on 128 MiB v5e/v6e, ~21 MiB on 64 MiB v7x.
    tile_budget = min(vmem_cap // 3, 48 << 20)

    # Bytes per lane column (nb = 1): double-buffered in + out tiles in the
    # activation dtype, plus ~2 live f32 intermediates inside the kernel.
    bytes_per_col = C * (4 * itemsize + 2 * 4)

    # L tile: full extent if the whole row fits, else the largest multiple of
    # 128 the budget allows (lane-dense stores; padded tail masked by Pallas).
    tl_cap = max(128, (tile_budget // bytes_per_col) // 128 * 128)
    tl = L if L <= tl_cap else tl_cap
    grid_l = pl.cdiv(L, tl)

    # v7x megacore: if N == 1 and one tile would cover all of L, split L in two
    # so both TensorCores get work (unless the problem is trivially small).
    if N == 1 and grid_l == 1 and L >= 256 and C * L * itemsize > (1 << 20):
        tl = ((pl.cdiv(L, 2) + 127) // 128) * 128
        grid_l = pl.cdiv(L, tl)

    # Pack batch rows per grid step so each step moves a decent slab (amortizes
    # the ~0.35 us/step pipeline overhead), but keep >= 2 steps when possible.
    nb = 1
    if N > 1 and grid_l == 1:
        per_row = C * tl * itemsize
        target = 1 << 20                      # ~1 MiB of input per step
        if per_row < target:
            nb = min(N, max(1, target // max(per_row, 1)))
            nb = min(nb, max(1, tile_budget // max(bytes_per_col * tl, 1)))
            while nb > 1 and pl.cdiv(N, nb) < 2:
                nb = (nb + 1) // 2
    return nb, tl


def _vmem_limit_bytes(C, nb, tl, itemsize, w_itemsize, vmem_cap):
    """Scoped VMEM limit: tiles + live intermediates + resident weight/bias."""
    limit_cap = (3 * vmem_cap) // 4           # ~96 MiB on v5e/v6e, ~48 MiB on v7x
    c8 = ((C + 7) // 8) * 8
    c128 = ((C + 127) // 128) * 128
    act = nb * C * tl
    need = (2 * 2 * act * itemsize            # in + out tiles, double-buffered
            + 2 * act * 4                     # live f32 intermediates in kernel
            + 2 * c8 * c128 * w_itemsize      # folded weight (double-buffered)
            + 2 * c8 * 128 * 4                # folded bias   (double-buffered)
            + (2 << 20))                      # headroom
    # TODO(synk): for very large C (folded weight alone approaching the limit)
    # add a C_in-tiled reduction grid axis with an f32 VMEM accumulator.
    return int(min(max(need, 16 << 20), limit_cap))


def subgroup_forward(x_ncl, params, *, tl=None, nb=None):
    """x_ncl: (N, C, L); params: w{1,2,3} as (C_out, C_in), b{1,2,3} as (C, 1).

    Numerically equivalent (up to f32 rounding) to feat3(feat2(feat1(x))).
    """
    N, C, L = x_ncl.shape
    itemsize = jnp.dtype(x_ncl.dtype).itemsize

    # Fold the three 1x1 convs into one affine map (exact: no nonlinearity).
    w1, w2, w3 = params["w1"], params["w2"], params["w3"]
    b1, b2, b3 = params["b1"], params["b2"], params["b3"]
    w_eff = (w3 @ (w2 @ w1)).astype(jnp.float32)
    b_eff = (w3 @ (w2 @ b1 + b2) + b3).astype(jnp.float32)   # stays f32
    if x_ncl.dtype == jnp.bfloat16:
        w_eff = w_eff.astype(jnp.bfloat16)    # native-rate MXU, f32 accumulation
    w_itemsize = jnp.dtype(w_eff.dtype).itemsize

    vmem_cap = _vmem_capacity_bytes()
    auto_nb, auto_tl = _pick_tiles(N, C, L, itemsize, vmem_cap)
    tl = auto_tl if tl is None else tl
    nb = auto_nb if nb is None else nb
    vmem_limit = _vmem_limit_bytes(C, nb, tl, itemsize, w_itemsize, vmem_cap)

    x_spec = pl.BlockSpec((nb, C, tl), lambda n, l: (n, 0, l))
    # Folded weight/bias are constant across the grid (index_map always (0, 0)),
    # so they are DMA'd once and stay resident in VMEM.  After folding their
    # footprint is just one C x C block, so default double-buffering is cheap.
    w_spec = pl.BlockSpec((C, C), lambda n, l: (0, 0))
    b_spec = pl.BlockSpec((C, 1), lambda n, l: (0, 0))

    return pl.pallas_call(
        _subgroup_kernel,
        out_shape=jax.ShapeDtypeStruct((N, C, L), x_ncl.dtype),
        grid=(pl.cdiv(N, nb), pl.cdiv(L, tl)),
        in_specs=[x_spec, w_spec, b_spec],
        out_specs=x_spec,
        compiler_params=pltpu.CompilerParams(
            dimension_semantics=("parallel", "parallel"),
            vmem_limit_bytes=vmem_limit),
    )(x_ncl, w_eff, b_eff)


def init_params(key, num_features):
    """Xavier-uniform weights in PyTorch Conv1d layout (C_out, C_in); bias = 0.01."""
    C = num_features
    bound = jnp.sqrt(6.0 / (C + C))       # fan_in = fan_out = C for a 1x1 conv
    keys = jax.random.split(key, 3)
    params = {}
    for i, k in enumerate(keys, start=1):
        params[f"w{i}"] = jax.random.uniform(k, (C, C), jnp.float32,
                                             minval=-bound, maxval=bound)
        params[f"b{i}"] = jnp.full((C, 1), 0.01, jnp.float32)
    return params


def _reference(x_ncl, params):
    """Pure-JAX reference matching PyTorch Conv1d(kernel_size=1) semantics."""
    h = x_ncl
    for i in (1, 2, 3):
        w = params[f"w{i}"]               # (C_out, C_in)
        b = params[f"b{i}"][:, 0]         # (C,)
        h = jnp.einsum("oc,ncl->nol", w, h) + b[None, :, None]
    return h


if __name__ == "__main__":
    key = jax.random.PRNGKey(0)
    k_x, k_p = jax.random.split(key)

    N, C, L = 2, 32, 256                  # batch, num_features, sequence length
    x = jax.random.normal(k_x, (N, C, L), jnp.float32)
    params = init_params(k_p, C)

    out = jax.block_until_ready(subgroup_forward(x, params))
    ref = _reference(x, params)
    assert out.shape == (N, C, L)
    assert jnp.allclose(out, ref, atol=1e-4, rtol=1e-4), "mismatch vs reference"

    # bf16 activation/weight path (native-rate MXU, half the HBM traffic).
    out_bf16 = jax.block_until_ready(
        subgroup_forward(x.astype(jnp.bfloat16), params))
    assert out_bf16.dtype == jnp.bfloat16
    assert jnp.allclose(out_bf16.astype(jnp.float32), ref, atol=1e-1, rtol=1e-1), \
        "bf16 path mismatch vs reference"

    print("KERNEL_OK")
</pallas_src>

<mosaic_0001>
module attributes {stable_mosaic.version = 11 : i64} {
  func.func @_subgroup_kernel(%arg0: i32, %arg1: i32, %arg2: memref<1x32x256xf32, #tpu.memory_space<vmem>>, %arg3: memref<32x32xf32, #tpu.memory_space<vmem>>, %arg4: memref<32x1xf32, #tpu.memory_space<vmem>>, %arg5: memref<1x32x256xf32, #tpu.memory_space<vmem>>) attributes {dimension_semantics = [#tpu.dimension_semantics<parallel>, #tpu.dimension_semantics<parallel>], iteration_bounds = array<i64: 2, 1>, scalar_prefetch = 0 : i64, scratch_operands = 0 : i64, tpu.core_type = #tpu.core_type<tc>, window_params = [{transform_indices = @transform_0, window_bounds = array<i64: 1, 32, 256>}, {pipeline_mode = #tpu.pipeline_mode<synchronous>, transform_indices = @transform_1, window_bounds = array<i64: 32, 32>}, {pipeline_mode = #tpu.pipeline_mode<synchronous>, transform_indices = @transform_2, window_bounds = array<i64: 32, 1>}, {transform_indices = @transform_3, window_bounds = array<i64: 1, 32, 256>}]} {
    %c0 = arith.constant 0 : index
    %c0_0 = arith.constant 0 : index
    %0 = vector.load %arg3[%c0, %c0_0] : memref<32x32xf32, #tpu.memory_space<vmem>>, vector<32x32xf32>
    %c0_1 = arith.constant 0 : index
    %c0_2 = arith.constant 0 : index
    %1 = vector.load %arg4[%c0_1, %c0_2] : memref<32x1xf32, #tpu.memory_space<vmem>>, vector<32x1xf32>
    %c0_3 = arith.constant 0 : index
    %c0_4 = arith.constant 0 : index
    %c0_5 = arith.constant 0 : index
    %2 = vector.load %arg2[%c0_3, %c0_4, %c0_5] : memref<1x32x256xf32, #tpu.memory_space<vmem>>, vector<1x32x256xf32>
    %3 = vector.shape_cast %2 : vector<1x32x256xf32> to vector<32x256xf32>
    %cst = arith.constant dense<0.000000e+00> : vector<32x256xf32>
    %4 = tpu.matmul %0, %3, %cst {dimension_numbers = #tpu.dot_dimension_numbers<[1], [0], [0], [1], [0, 0, 1, 1], [], []>} : vector<32x32xf32>, vector<32x256xf32>, vector<32x256xf32> -> vector<32x256xf32>
    %5 = vector.broadcast %1 : vector<32x1xf32> to vector<32x256xf32>
    %6 = arith.addf %4, %5 : vector<32x256xf32>
    %c0_6 = arith.constant 0 : index
    %c0_7 = arith.constant 0 : index
    %c0_8 = arith.constant 0 : index
    %7 = vector.load %arg5[%c0_6, %c0_7, %c0_8] : memref<1x32x256xf32, #tpu.memory_space<vmem>>, vector<1x32x256xf32>
    %8 = vector.shape_cast %7 : vector<1x32x256xf32> to vector<32x256xf32>
    %9 = vector.shape_cast %6 : vector<32x256xf32> to vector<1x32x256xf32>
    tpu.vector_store %arg5[%c0_6, %c0_7, %c0_8], %9 {strides = array<i32>} : memref<1x32x256xf32, #tpu.memory_space<vmem>>, vector<1x32x256xf32>,
    return
  }
  func.func @transform_0(%arg0: i32, %arg1: i32) -> (i32, i32, i32) {
    %c0_i32 = arith.constant 0 : i32
    %c0_i32_0 = arith.constant 0 : i32
    return %arg0, %c0_i32, %arg1 : i32, i32, i32
  }
  func.func @transform_1(%arg0: i32, %arg1: i32) -> (i32, i32) {
    %c0_i32 = arith.constant 0 : i32
    %c0_i32_0 = arith.constant 0 : i32
    %c0_i32_1 = arith.constant 0 : i32
    return %c0_i32, %c0_i32_0 : i32, i32
  }
  func.func @transform_2(%arg0: i32, %arg1: i32) -> (i32, i32) {
    %c0_i32 = arith.constant 0 : i32
    %c0_i32_0 = arith.constant 0 : i32
    %c0_i32_1 = arith.constant 0 : i32
    return %c0_i32, %c0_i32_0 : i32, i32
  }
  func.func @transform_3(%arg0: i32, %arg1: i32) -> (i32, i32, i32) {
    %c0_i32 = arith.constant 0 : i32
    %c0_i32_0 = arith.constant 0 : i32
    return %arg0, %c0_i32, %arg1 : i32, i32, i32
  }
}

</mosaic_0001>

<llo_original>
// kernel: tpu_custom_call.1
$region0: #{tpu_custom_call.1}
  #allocation0 [shape = 'u32[]', space=smem, size = 0x4, offset = 0x4, fixed_abs, tag = 'smem constant byte address 0x4 - core index']
  #allocation1 [shape = 'u32[72,128]{1,0:T(1,128)}', space=vmem, size = 0x9000, scoped, tag = 'internal scratch']
  %s0 = inlined_call_operand.hbm [shape: f32[2,32,256], index: 0, kind: input, shape index: {}]
  %s1 = inlined_call_operand.vmem [shape: f32[32,32], index: 1, kind: input, shape index: {}]
  %s2 = inlined_call_operand.vmem [shape: f32[32,1], index: 2, kind: input, shape index: {}]
  %s3 = inlined_call_operand.hbm [shape: f32[2,32,256], index: 3, kind: output, shape index: {}]
  %s4 = sld [smem:[#allocation0]]
  $region49: #{tpu_custom_call.1} parent=0
    _
  %s6 = ssub.s32 1, %s4
  %s7 = scalar_select 0, %s6, %s4
  $region1: #{tpu_custom_call.1} parent=0
    #allocation2 [shape = 'u8[65536]{0}', space=vmem, size = 0x10000, scoped, tag = 'input window, operand 0']
    #allocation3 [shape = 's32[2]{0}', space=sflag, size = 0x8, scoped, tag = 'scoped memory for tpu_custom_call.1']
    #allocation4 [shape = 's32[2]{0}', space=sflag, size = 0x8, scoped, tag = 'scoped memory for tpu_custom_call.1']
    #allocation5 [shape = 'u8[65536]{0}', space=vmem, size = 0x10000, scoped, tag = 'output window, operand 0']
    %8 = vsyncpa [#allocation3], 0
    %s9 = scalar_lea.sflag [#allocation3], 1
    %10 = vsyncpa %s9, 0
    %11 = vsyncpa [#allocation4], 0
    %s12 = scalar_lea.sflag [#allocation4], 1
    %13 = vsyncpa %s12, 0
    loop: start=0, step=1, limit=4
    $region2: #{tpu_custom_call.1} parent=1 // loop_pre_header
      _
    $region3: #{tpu_custom_call.1} parent=1 // loop_header
      %s15 = sphi 0, %s19
      %p16 = scmp.ge.s32.totalorder %s15, 4
      %s22 = sphi 0, %s34
      %s23 = sphi 0, %s30
      %s24 = sphi 0, %s22
      %s25 = sphi 0, %s23
      %s26 = sphi 0, %s24
      %s27 = sphi 0, %s25
      %s39 = sphi 0, %s41
      %s42 = sphi 0, %s39
      %s43 = sphi 0, %s42
      %s59 = sphi 0, %s43
      %s63 = sphi 0, %s63
      %s65 = sphi 0, %s63
      %s66 = sphi 0, %s65
      %s80 = sphi 0, %s66
      %s84 = sphi 0, %s84
      %s86 = sphi 0, %s84
      %s87 = sphi 0, %s86
      %s101 = sphi 0, %s87
      %s109 = sphi 0, %s111
      %s112 = sphi 0, %s109
      %s113 = sphi 0, %s112
      %s129 = sphi 0, %s113
    $region4: #{tpu_custom_call.1} parent=1 // loop_header_branch
      %18 = sbr.rel (%p16) target = $region8
    $region5: #{tpu_custom_call.1} parent=1 // loop_body
      %s20 = ssub.s32 %s15, 1
      %s21 = ssub.s32 %s15, 2
      %s28 = sadd.s32 1, %s23
      %p29 = scmp.ge.s32.totalorder %s28, 1
      %s30 = scalar_select %p29, 0, %s28
      %s31 = sadd.s32 1, %s22
      %s32 = scalar_select %p29, %s31, %s22
      %p33 = scmp.ge.s32.totalorder %s32, 2
      %s34 = scalar_select %p33, 0, %s32
      %s35 = ssub.s32 %s22, %s34
      %s36 = ssub.s32 %s23, %s30
      %s37 = sor.u32 %s35, %s36
      %p38 = scmp.eq.s32.totalorder %s37, 0
      %s40 = sadd.s32 %s39, 1
      %s41 = scalar_select %p38, %s39, %s40
      %p44 = pneg %p38
      %p45 = scmp.eq.s32.totalorder %s15, 1
      %p46 = por %p44, %p45
      %p47 = scmp.ne.s32.totalorder %s39, %s42
      %p48 = scmp.eq.s32.totalorder %s15, 0
      %p49 = por %p47, %p48
      %p50 = scmp.ne.s32.totalorder %s39, %s42
      %p51 = scmp.eq.s32.totalorder %s20, 1
      %p52 = por %p50, %p51
      %p53 = scmp.ne.s32.totalorder %s42, %s43
      %p54 = scmp.eq.s32.totalorder %s20, 0
      %p55 = por %p53, %p54
      %p56 = scmp.ne.s32.totalorder %s42, %s43
      %p57 = scmp.eq.s32.totalorder %s21, 1
      %p58 = por %p56, %p57
      %p60 = scmp.ne.s32.totalorder %s43, %s59
      %p61 = scmp.eq.s32.totalorder %s21, 0
      %p62 = por %p60, %p61
      %s64 = sadd.s32 %s63, 1
      %p67 = scmp.eq.s32.totalorder %s15, 1
      %p68 = scmp.ne.s32.totalorder %s63, %s65
      %p69 = scmp.eq.s32.totalorder %s15, 0
      %p70 = por %p68, %p69
      %p71 = scmp.ne.s32.totalorder %s63, %s65
      %p72 = scmp.eq.s32.totalorder %s20, 1
      %p73 = por %p71, %p72
      %p74 = scmp.ne.s32.totalorder %s65, %s66
      %p75 = scmp.eq.s32.totalorder %s20, 0
      %p76 = por %p74, %p75
      %p77 = scmp.ne.s32.totalorder %s65, %s66
      %p78 = scmp.eq.s32.totalorder %s21, 1
      %p79 = por %p77, %p78
      %p81 = scmp.ne.s32.totalorder %s66, %s80
      %p82 = scmp.eq.s32.totalorder %s21, 0
      %p83 = por %p81, %p82
      %s85 = sadd.s32 %s84, 1
      %p88 = scmp.eq.s32.totalorder %s15, 1
      %p89 = scmp.ne.s32.totalorder %s84, %s86
      %p90 = scmp.eq.s32.totalorder %s15, 0
      %p91 = por %p89, %p90
      %p92 = scmp.ne.s32.totalorder %s84, %s86
      %p93 = scmp.eq.s32.totalorder %s20, 1
      %p94 = por %p92, %p93
      %p95 = scmp.ne.s32.totalorder %s86, %s87
      %p96 = scmp.eq.s32.totalorder %s20, 0
      %p97 = por %p95, %p96
      %p98 = scmp.ne.s32.totalorder %s86, %s87
      %p99 = scmp.eq.s32.totalorder %s21, 1
      %p100 = por %p98, %p99
      %p102 = scmp.ne.s32.totalorder %s87, %s101
      %p103 = scmp.eq.s32.totalorder %s21, 0
      %p104 = por %p102, %p103
      %s105 = ssub.s32 %s22, %s34
      %s106 = ssub.s32 %s23, %s30
      %s107 = sor.u32 %s105, %s106
      %p108 = scmp.eq.s32.totalorder %s107, 0
      %s110 = sadd.s32 %s109, 1
      %s111 = scalar_select %p108, %s109, %s110
      %p114 = pneg %p108
      %p115 = scmp.eq.s32.totalorder %s15, 1
      %p116 = por %p114, %p115
      %p117 = scmp.ne.s32.totalorder %s109, %s112
      %p118 = scmp.eq.s32.totalorder %s15, 0
      %p119 = por %p117, %p118
      %p120 = scmp.ne.s32.totalorder %s109, %s112
      %p121 = scmp.eq.s32.totalorder %s20, 1
      %p122 = por %p120, %p121
      %p123 = scmp.ne.s32.totalorder %s112, %s113
      %p124 = scmp.eq.s32.totalorder %s20, 0
      %p125 = por %p123, %p124
      %p126 = scmp.ne.s32.totalorder %s112, %s113
      %p127 = scmp.eq.s32.totalorder %s21, 1
      %p128 = por %p126, %p127
      %p130 = scmp.ne.s32.totalorder %s113, %s129
      %p131 = scmp.eq.s32.totalorder %s21, 0
      %p132 = por %p130, %p131
      %p133 = scmp.le.s32.totalorder 1, %s15
      %p134 = scmp.lt.s32.totalorder %s15, 3
      %p135 = pnand %p133, %p134
      %p136 = pneg %p135
      // Predicated region
      $region9: #{tpu_custom_call.1} parent=5 // pred_check
        _
      $region10: #{tpu_custom_call.1} parent=5 // pred_check_branch
        %138 = sbr.rel (%p135) target = $region12
      $region11: #{tpu_custom_call.1} parent=5 // pred_region
        %s139 = ssub.s32 %s15, 1
        // Predicated region
        $region13: #{tpu_custom_call.1} parent=11 // pred_check
          %p140 = pneg %p76
        $region14: #{tpu_custom_call.1} parent=11 // pred_check_branch
          %142 = sbr.rel (%p140) target = $region16
        $region15: #{tpu_custom_call.1} parent=11 // pred_region
          _
        $region16: #{tpu_custom_call.1} parent=11 // pred_fallthru
          _
        // Predicated region
        $region17: #{tpu_custom_call.1} parent=11 // pred_check
          %p143 = pneg %p97
        $region18: #{tpu_custom_call.1} parent=11 // pred_check_branch
          %145 = sbr.rel (%p143) target = $region20
        $region19: #{tpu_custom_call.1} parent=11 // pred_region
          _
        $region20: #{tpu_custom_call.1} parent=11 // pred_fallthru
          _
      $region12: #{tpu_custom_call.1} parent=5 // pred_fallthru
        _
      %p146 = scmp.lt.s32.totalorder %s15, 2
      // Predicated region
      $region21: #{tpu_custom_call.1} parent=5 // pred_check
        %p147 = pneg %p146
      $region22: #{tpu_custom_call.1} parent=5 // pred_check_branch
        %149 = sbr.rel (%p147) target = $region24
      $region23: #{tpu_custom_call.1} parent=5 // pred_region
        // Predicated region
        $region25: #{tpu_custom_call.1} parent=23 // pred_check
          %p150 = pneg %p49
        $region26: #{tpu_custom_call.1} parent=23 // pred_check_branch
          %152 = sbr.rel (%p150) target = $region28
        $region27: #{tpu_custom_call.1} parent=23 // pred_region
          %s153 = sand.u32 %s39, 1
          %s154 = scalar_lea.sflag [#allocation3], %s153
          %s155 = sand.u32 %s39, 1
          %s156 = smul.addr %s155, 64
          %s157 = scalar_lea.vmem [#allocation2], %s156
          %s158 = smul.u32 2, %s23
          %160 = vsyncadd %s154, 0
          %s161 = smul.addr %s22, 8
          %s162 = sadd.s32 %s158, %s161
          %s163 = smul.addr %s162, 8
          %s164 = scalar_lea.hbm %s0, %s163
          %s165 = sshll.u32 %s164, 4
          %s166 = int_to_ptr.hbm [resolvable:$true] %s165
          %s167 = sshll.u32 %s157, 4
          %s168 = int_to_ptr.vmem [resolvable:$true] %s167
          %173 = dma.hbm_to_vmem [thread:$0]  %s166, 1024, %s168, %s154, 256, 256, 16
        $region28: #{tpu_custom_call.1} parent=23 // pred_fallthru
          _
      $region24: #{tpu_custom_call.1} parent=5 // pred_fallthru
        _
      %p174 = scmp.le.s32.totalorder 1, %s15
      %p175 = scmp.lt.s32.totalorder %s15, 3
      %p176 = pnand %p174, %p175
      %p177 = pneg %p176
      // Predicated region
      $region29: #{tpu_custom_call.1} parent=5 // pred_check
        _
      $region30: #{tpu_custom_call.1} parent=5 // pred_check_branch
        %179 = sbr.rel (%p176) target = $region32
      $region31: #{tpu_custom_call.1} parent=5 // pred_region
        %s180 = ssub.s32 %s15, 1
        %s181 = sand.u32 %s42, 1
        %s182 = scalar_lea.sflag [#allocation3], %s181
        %s183 = sand.u32 %s42, 1
        %s184 = smul.addr %s183, 64
        %s185 = scalar_lea.vmem [#allocation2], %s184
        // Predicated region
        $region33: #{tpu_custom_call.1} parent=31 // pred_check
          %p186 = pneg %p55
        $region34: #{tpu_custom_call.1} parent=31 // pred_check_branch
          %188 = sbr.rel (%p186) target = $region36
        $region35: #{tpu_custom_call.1} parent=31 // pred_region
          %190 = dma.done %s182, 1024
        $region36: #{tpu_custom_call.1} parent=31 // pred_fallthru
          _
        %s191 = sand.u32 %s42, 1
        %s192 = scalar_lea.sflag [#allocation3], %s191
        %s193 = sand.u32 %s42, 1
        %s194 = smul.addr %s193, 64
        %s195 = scalar_lea.vmem [#allocation2], %s194
        %p196 = pneg %p55
        %p197 = pneg %p52
        %p198 = pneg %p76
        %p199 = pneg %p73
        %p200 = pneg %p97
        %p201 = pneg %p94
        %p202 = pneg %p125
        %p203 = pneg %p122
        %s204 = sand.u32 %s112, 1
        %s205 = scalar_lea.sflag [#allocation4], %s204
        %s206 = sand.u32 %s112, 1
        %s207 = smul.addr %s206, 64
        %s208 = scalar_lea.vmem [#allocation5], %s207
        %s209 = smul.u32 2, %s25
        %s210 = smul.u32 2, %s25
        %v211 = vld [vmem:[%s1] sm:$0xff]
        %v212 = vld [vmem:[%s1 + $0x8] sm:$0xff]
        %v213 = vld [vmem:[%s1 + $0x10] sm:$0xff]
        %v214 = vld [vmem:[%s1 + $0x18] sm:$0xff]
        %v215 = vld [vmem:[%s2] sm:$0xff]
        %v216 = vld [vmem:[%s2 + $0x8] sm:$0xff]
        %v217 = vld [vmem:[%s2 + $0x10] sm:$0xff]
        %v218 = vld [vmem:[%s2 + $0x18] sm:$0xff]
        %v219 = vld [vmem:[%s185] sm:$0xff]
        %v220 = vld [vmem:[%s185 + $0x8] sm:$0xff]
        %v221 = vld [vmem:[%s185 + $0x10] sm:$0xff]
        %v222 = vld [vmem:[%s185 + $0x18] sm:$0xff]
        %v223 = vld [vmem:[%s185 + $0x20] sm:$0xff]
        %v224 = vld [vmem:[%s185 + $0x28] sm:$0xff]
        %v225 = vld [vmem:[%s185 + $0x30] sm:$0xff]
        %v226 = vld [vmem:[%s185 + $0x38] sm:$0xff]
        %228 = vset.pattern.permute.xlu0 0
        %229 = vperm.xlu0 %228, %v215
        %v230 = vpop.permute.xlu0 %229
        %233 = vset.pattern.permute.xlu0 0
        %234 = vperm.xlu0 %233, %v216
        %v235 = vpop.permute.xlu0 %234
        %238 = vset.pattern.permute.xlu0 0
        %239 = vperm.xlu0 %238, %v217
        %v240 = vpop.permute.xlu0 %239
        %243 = vset.pattern.permute.xlu0 0
        %244 = vperm.xlu0 %243, %v218
        %v245 = vpop.permute.xlu0 %244
        %vm247 = vcmask 261120
        %v249 = vsel %vm247, %v211, 0
        %v252 = vsel %vm247, %v212, 0
        %v255 = vsel %vm247, %v213, 0
        %v258 = vsel %vm247, %v214, 0
        %260 = vmatpush.msra.mxu0 0.0
        %261 = vmatpush.msra.mxu0 0.0
        %262 = vmatpush.msra.mxu0 0.0
        %263 = vmatpush.msra.mxu0 0.0
        %264 = vmatpush.msra.mxu0 0.0
        %265 = vmatpush.msra.mxu0 0.0
        %266 = vmatpush.msra.mxu0 0.0
        %267 = vmatpush.msra.mxu0 0.0
        %268 = vmatpush.msra.mxu0 0.0
        %269 = vmatpush.msra.mxu0 0.0
        %270 = vmatpush.msra.mxu0 0.0
        %271 = vmatpush.msra.mxu0 0.0
        %272 = vmatpush.msra.mxu0 %v225
        %273 = vmatpush.msra.mxu0 %v223
        %274 = vmatpush.msra.mxu0 %v221
        %275 = vmatpush.msra.mxu0 %v219
        %276 = vmatmul.f32.gmra.mxu0 %v249
        %v277 = vpop.f32.mrf.mxu0
        %v278 = vadd.f32 %v230, %v277
        %279 = vmatmul.f32.gmra.mxu0 %v252
        %v280 = vpop.f32.mrf.mxu0
        %v281 = vadd.f32 %v235, %v280
        %282 = vmatmul.f32.gmra.mxu0 %v255
        %v283 = vpop.f32.mrf.mxu0
        %v284 = vadd.f32 %v240, %v283
        %285 = vmatmul.f32.gmra.mxu0 %v258
        %v286 = vpop.f32.mrf.mxu0
        %v287 = vadd.f32 %v245, %v286
        %288 = vdwg.mxu0
        %289 = vmatpush.msra.mxu0 0.0
        %290 = vmatpush.msra.mxu0 0.0
        %291 = vmatpush.msra.mxu0 0.0
        %292 = vmatpush.msra.mxu0 0.0
        %293 = vmatpush.msra.mxu0 0.0
        %294 = vmatpush.msra.mxu0 0.0
        %295 = vmatpush.msra.mxu0 0.0
        %296 = vmatpush.msra.mxu0 0.0
        %297 = vmatpush.msra.mxu0 0.0
        %298 = vmatpush.msra.mxu0 0.0
        %299 = vmatpush.msra.mxu0 0.0
        %300 = vmatpush.msra.mxu0 0.0
        %301 = vmatpush.msra.mxu0 %v226
        %302 = vmatpush.msra.mxu0 %v224
        %303 = vmatpush.msra.mxu0 %v222
        %304 = vmatpush.msra.mxu0 %v220
        %305 = vmatmul.f32.gmra.mxu0 %v249
        %v306 = vpop.f32.mrf.mxu0
        %v307 = vadd.f32 %v230, %v306
        %308 = vmatmul.f32.gmra.mxu0 %v252
        %v309 = vpop.f32.mrf.mxu0
        %v310 = vadd.f32 %v235, %v309
        %311 = vmatmul.f32.gmra.mxu0 %v255
        %v312 = vpop.f32.mrf.mxu0
        %v313 = vadd.f32 %v240, %v312
        %314 = vmatmul.f32.gmra.mxu0 %v258
        %v315 = vpop.f32.mrf.mxu0
        %v316 = vadd.f32 %v245, %v315
        %317 = vdwg.mxu0
        %318 = vst [vmem:[%s208] sm:$0xff] %v278
        %319 = vst [vmem:[%s208 + $0x8] sm:$0xff] %v307
        %320 = vst [vmem:[%s208 + $0x10] sm:$0xff] %v281
        %321 = vst [vmem:[%s208 + $0x18] sm:$0xff] %v310
        %322 = vst [vmem:[%s208 + $0x20] sm:$0xff] %v284
        %323 = vst [vmem:[%s208 + $0x28] sm:$0xff] %v313
        %324 = vst [vmem:[%s208 + $0x30] sm:$0xff] %v287
        %325 = vst [vmem:[%s208 + $0x38] sm:$0xff] %v316
        %s326 = sand.u32 %s112, 1
        %s327 = scalar_lea.sflag [#allocation4], %s326
        %s328 = sand.u32 %s112, 1
        %s329 = smul.addr %s328, 64
        %s330 = scalar_lea.vmem [#allocation5], %s329
        // Predicated region
        $region37: #{tpu_custom_call.1} parent=31 // pred_check
          %p331 = pneg %p122
        $region38: #{tpu_custom_call.1} parent=31 // pred_check_branch
          %333 = sbr.rel (%p331) target = $region40
        $region39: #{tpu_custom_call.1} parent=31 // pred_region
          %s334 = smul.u32 2, %s25
          %336 = vsyncadd %s327, 0
          %s337 = smul.addr %s24, 8
          %s338 = sadd.s32 %s334, %s337
          %s339 = smul.addr %s338, 8
          %s340 = scalar_lea.hbm %s3, %s339
          %s341 = sshll.u32 %s330, 4
          %s342 = int_to_ptr.vmem [resolvable:$true] %s341
          %s343 = sshll.u32 %s340, 4
          %s344 = int_to_ptr.hbm [resolvable:$true] %s343
          %349 = dma.vmem_to_hbm [thread:$0]  %s342, 1024, %s344, %s327, 256, 256, 16
        $region40: #{tpu_custom_call.1} parent=31 // pred_fallthru
          _
      $region32: #{tpu_custom_call.1} parent=5 // pred_fallthru
        _
      %p350 = scmp.le.s32.totalorder 2, %s15
      // Predicated region
      $region41: #{tpu_custom_call.1} parent=5 // pred_check
        %p351 = pneg %p350
      $region42: #{tpu_custom_call.1} parent=5 // pred_check_branch
        %353 = sbr.rel (%p351) target = $region44
      $region43: #{tpu_custom_call.1} parent=5 // pred_region
        %s354 = ssub.s32 %s15, 2
        // Predicated region
        $region45: #{tpu_custom_call.1} parent=43 // pred_check
          %p355 = pneg %p128
        $region46: #{tpu_custom_call.1} parent=43 // pred_check_branch
          %357 = sbr.rel (%p355) target = $region48
        $region47: #{tpu_custom_call.1} parent=43 // pred_region
          %s358 = sand.u32 %s113, 1
          %s359 = scalar_lea.sflag [#allocation4], %s358
          %s360 = sand.u32 %s113, 1
          %s361 = smul.addr %s360, 64
          %s362 = scalar_lea.vmem [#allocation5], %s361
          %364 = dma.done %s359, 1024
        $region48: #{tpu_custom_call.1} parent=43 // pred_fallthru
          _
      $region44: #{tpu_custom_call.1} parent=5 // pred_fallthru
        _
    $region6: #{tpu_custom_call.1} parent=1 // loop_footer
      %s19 = sadd.s32 1, %s15
    $region7: #{tpu_custom_call.1} parent=1 // loop_footer_branch
      %14 = sbr.rel target = $region3
    $region8: #{tpu_custom_call.1} parent=1 // loop_exit
      _
    %365 = vsyncpa [#allocation3], 1
    %s366 = scalar_lea.sflag [#allocation3], 1
    %367 = vsyncpa %s366, 1
    %368 = vsyncpa [#allocation4], 1
    %s369 = scalar_lea.sflag [#allocation4], 1
    %370 = vsyncpa %s369, 1

</llo_original>
